<compile_context>
chip_gen: v6e
topology: v6e:2x2x1
jax: 0.10.0
libtpu: 0.0.40
codegen_flags: <defaults>
</compile_context>

<pallas_src>
import jax
import jax.numpy as jnp
from jax.experimental import pallas as pl
from jax.experimental.pallas import tpu as pltpu


def _round_up(x: int, m: int) -> int:
    return ((x + m - 1) // m) * m


def _make_kernel(multi_k: bool, compute_dtype):
    """Build the kernel body. multi_k: whether there is a K reduction grid axis."""

    def _maybe_cast(x_blk, w_blk):
        if compute_dtype is not None:
            return x_blk.astype(compute_dtype), w_blk.astype(compute_dtype)
        if x_blk.dtype != w_blk.dtype:
            # e.g. bf16 weights prepared once outside; cast activations to match.
            return x_blk.astype(w_blk.dtype), w_blk
        return x_blk, w_blk

    if multi_k:
        def kernel(x_ref, w_ref, b_ref, o_ref, acc_ref):
            k = pl.program_id(2)

            @pl.when(k == 0)
            def _():
                # Initialize the accumulator with the bias (saves a zero-fill
                # plus a separate VPU add in the finalize branch).
                acc_ref[...] = jnp.broadcast_to(
                    b_ref[...].astype(jnp.float32), acc_ref.shape)

            x_blk, w_blk = _maybe_cast(x_ref[...], w_ref[...])
            # W is pre-transposed to (K, N) layout: plain (1,)x(0,) contraction,
            # no per-tile transpose on the MXU path.
            acc_ref[...] += jnp.dot(x_blk, w_blk,
                                    preferred_element_type=jnp.float32)

            @pl.when(k == pl.num_programs(2) - 1)
            def _():
                o_ref[...] = acc_ref[...].astype(o_ref.dtype)

        return kernel

    def kernel(x_ref, w_ref, b_ref, o_ref):
        x_blk, w_blk = _maybe_cast(x_ref[...], w_ref[...])
        acc = jnp.dot(x_blk, w_blk, preferred_element_type=jnp.float32)
        o_ref[...] = (acc + b_ref[...].astype(jnp.float32)).astype(o_ref.dtype)

    return kernel


def prepare_linear_params(weight, bias, *, tn=512, tk=512, param_dtype=None):
    """One-time parameter prep (hoisted off the hot path).

    weight: (D_out, D_in) PyTorch nn.Linear layout.
    bias:   (D_out,)
    Returns a dict with the transposed/padded weight (Kp, Np), padded 2-D bias,
    and the tile sizes used for padding.
    """
    D_out, D_in = weight.shape
    Np0 = _round_up(D_out, 128)
    Kp0 = _round_up(D_in, 128)

    # Effective tiles: force (8,128)-rule-compatible sizes regardless of input.
    tn_e = min(_round_up(max(tn, 128), 128), Np0)
    # Prefer >= 2 N-grid points so v7x's two TensorCores both get work
    # (harmless on single-TC v5e/v6e; x re-reads across N tiles are cheap).
    if Np0 >= 256 and Np0 // tn_e < 2:
        tn_e = max(128, ((Np0 // 2) // 128) * 128)
    tk_e = min(_round_up(max(tk, 128), 128), Kp0)

    Np = _round_up(D_out, tn_e)
    Kp = _round_up(D_in, tk_e)

    # One-time transpose to (K, N) so the kernel never transposes per tile.
    w_t = jnp.asarray(weight).T
    if (Kp, Np) != (D_in, D_out):
        w_t = jnp.pad(w_t, ((0, Kp - D_in), (0, Np - D_out)))
    if param_dtype is not None:
        w_t = w_t.astype(param_dtype)

    b_p = jnp.asarray(bias).astype(jnp.float32)
    if Np != D_out:
        b_p = jnp.pad(b_p, (0, Np - D_out))
    b2d = b_p.reshape(1, Np)

    return dict(w=w_t, b=b2d, d_out=D_out, d_in=D_in,
                np_=Np, kp=Kp, tn=tn_e, tk=tk_e)


def linear_classifier_forward(x, params, *, tm=512, compute_dtype=None):
    """y = x @ W^T + b using pre-prepared params.  x: (B, D_in) -> (B, D_out)."""
    w_p, b2d = params["w"], params["b"]
    D_out, D_in = params["d_out"], params["d_in"]
    Np, Kp = params["np_"], params["kp"]
    tn_e, tk_e = params["tn"], params["tk"]

    B, d_in = x.shape
    assert d_in == D_in, f"expected D_in={D_in}, got {d_in}"

    # M tile covers the whole (padded) batch whenever it fits (<=512 rows),
    # so the weight matrix is streamed from HBM exactly once per call.
    tm_e = min(_round_up(max(tm, 8), 8), _round_up(B, 8))
    Bp = _round_up(B, tm_e)
    x_p = x if (Bp == B and Kp == D_in) else jnp.pad(
        x, ((0, Bp - B), (0, Kp - D_in)))

    grid_m = Bp // tm_e
    grid_n = Np // tn_e
    grid_k = Kp // tk_e
    multi_k = grid_k > 1

    cost = pl.CostEstimate(
        flops=2 * Bp * Kp * Np,
        transcendentals=0,
        bytes_accessed=(grid_n * Bp * Kp * x_p.dtype.itemsize   # x re-read per N tile
                        + grid_m * Kp * Np * w_p.dtype.itemsize  # W re-read per M tile
                        + Bp * Np * x.dtype.itemsize             # output
                        + Np * 4),                               # bias
    )

    kernel = _make_kernel(multi_k, compute_dtype)

    if multi_k:
        grid = (grid_m, grid_n, grid_k)
        in_specs = [
            pl.BlockSpec((tm_e, tk_e), lambda i, j, k: (i, k)),   # x (M, K)
            pl.BlockSpec((tk_e, tn_e), lambda i, j, k: (k, j)),   # W^T (K, N)
            pl.BlockSpec((1, tn_e), lambda i, j, k: (0, j)),      # bias
        ]
        out_specs = pl.BlockSpec((tm_e, tn_e), lambda i, j, k: (i, j))
        scratch = [pltpu.VMEM((tm_e, tn_e), jnp.float32)]
        semantics = ("parallel", "parallel", "arbitrary")
    else:
        grid = (grid_m, grid_n)
        in_specs = [
            pl.BlockSpec((tm_e, tk_e), lambda i, j: (i, 0)),      # x resident over j
            pl.BlockSpec((tk_e, tn_e), lambda i, j: (0, j)),
            pl.BlockSpec((1, tn_e), lambda i, j: (0, j)),
        ]
        out_specs = pl.BlockSpec((tm_e, tn_e), lambda i, j: (i, j))
        scratch = []
        semantics = ("parallel", "parallel")

    out_p = pl.pallas_call(
        kernel,
        out_shape=jax.ShapeDtypeStruct((Bp, Np), x.dtype),
        grid_spec=pltpu.PrefetchScalarGridSpec(
            num_scalar_prefetch=0,
            grid=grid,
            in_specs=in_specs,
            out_specs=out_specs,
            scratch_shapes=scratch,
        ),
        compiler_params=pltpu.CompilerParams(
            dimension_semantics=semantics,
            # <= ~48 MiB keeps headroom on v7x's 64 MiB VMEM; above the 16/32
            # MiB scoped defaults on v5e/v6e. These tiles use well under that.
            vmem_limit_bytes=48 * 1024 * 1024,
        ),
        cost_estimate=cost,
    )(x_p, w_p, b2d)

    if Bp == B and Np == D_out:
        return out_p
    return out_p[:B, :D_out]


def linear_classifier(x, weight, bias, **kwargs):
    """Convenience one-shot wrapper (prep + forward). Prefer preparing once."""
    params = prepare_linear_params(weight, bias)
    return linear_classifier_forward(x, params, **kwargs)


if __name__ == "__main__":
    key = jax.random.PRNGKey(0)

    # --- Small shapes consistent with the module: batch=8, in=32, out=16 ---
    B, D_in, D_out = 8, 32, 16
    kx, kw, kb = jax.random.split(key, 3)
    bound = 1.0 / (D_in ** 0.5)
    weight = jax.random.uniform(kw, (D_out, D_in), jnp.float32, -bound, bound)
    bias = jax.random.uniform(kb, (D_out,), jnp.float32, -bound, bound)
    x = jax.random.normal(kx, (B, D_in), jnp.float32)

    params = prepare_linear_params(weight, bias)          # one-time prep
    y = jax.block_until_ready(linear_classifier_forward(x, params))
    y_ref = x @ weight.T + bias
    assert y.shape == (B, D_out)
    assert jnp.allclose(y, y_ref, atol=1e-5, rtol=1e-5)

    # --- Larger aligned shapes: whole-batch M tile, split N grid (>=2 tiles) ---
    B2, Din2, Dout2 = 256, 256, 256
    k2x, k2w, k2b = jax.random.split(jax.random.PRNGKey(1), 3)
    bound2 = 1.0 / (Din2 ** 0.5)
    w2 = jax.random.uniform(k2w, (Dout2, Din2), jnp.float32, -bound2, bound2)
    b2 = jax.random.uniform(k2b, (Dout2,), jnp.float32, -bound2, bound2)
    x2 = jax.random.normal(k2x, (B2, Din2), jnp.float32)

    p2 = prepare_linear_params(w2, b2)
    y2 = jax.block_until_ready(linear_classifier_forward(x2, p2))
    y2_ref = x2 @ w2.T + b2
    assert y2.shape == (B2, Dout2)
    assert jnp.allclose(y2, y2_ref, atol=1e-4, rtol=1e-4)

    # --- Multi-K accumulator path + ragged D_out (exercises pl.when init/fin) ---
    B3, Din3, Dout3 = 128, 1024, 640
    k3x, k3w, k3b = jax.random.split(jax.random.PRNGKey(2), 3)
    bound3 = 1.0 / (Din3 ** 0.5)
    w3 = jax.random.uniform(k3w, (Dout3, Din3), jnp.float32, -bound3, bound3)
    b3 = jax.random.uniform(k3b, (Dout3,), jnp.float32, -bound3, bound3)
    x3 = jax.random.normal(k3x, (B3, Din3), jnp.float32)

    p3 = prepare_linear_params(w3, b3)                    # tk=512 -> K grid = 2
    y3 = jax.block_until_ready(linear_classifier_forward(x3, p3))
    y3_ref = x3 @ w3.T + b3
    assert y3.shape == (B3, Dout3)
    assert jnp.allclose(y3, y3_ref, atol=1e-4, rtol=1e-4)

    # --- Optional bf16-weight inference path (halves W HBM traffic on v6e/v7x) ---
    p3_bf16 = prepare_linear_params(w3, b3, param_dtype=jnp.bfloat16)
    y3b = jax.block_until_ready(
        linear_classifier_forward(x3, p3_bf16, compute_dtype=jnp.bfloat16))
    assert y3b.shape == (B3, Dout3)
    assert jnp.allclose(y3b, y3_ref, atol=1e-1, rtol=5e-2)

    print("KERNEL_OK")
</pallas_src>

<mosaic_0001>
module attributes {stable_mosaic.version = 11 : i64} {
  func.func @kernel(%arg0: i32, %arg1: i32, %arg2: memref<8x128xf32, #tpu.memory_space<vmem>>, %arg3: memref<128x128xf32, #tpu.memory_space<vmem>>, %arg4: memref<1x128xf32, #tpu.memory_space<vmem>>, %arg5: memref<8x128xf32, #tpu.memory_space<vmem>>) attributes {dimension_semantics = [#tpu.dimension_semantics<parallel>, #tpu.dimension_semantics<parallel>], iteration_bounds = array<i64: 1, 1>, scalar_prefetch = 0 : i64, scratch_operands = 0 : i64, tpu.core_type = #tpu.core_type<tc>, window_params = [{transform_indices = @transform_0, window_bounds = array<i64: 8, 128>}, {transform_indices = @transform_1, window_bounds = array<i64: 128, 128>}, {transform_indices = @transform_2, window_bounds = array<i64: 1, 128>}, {transform_indices = @transform_3, window_bounds = array<i64: 8, 128>}]} {
    %c0 = arith.constant 0 : index
    %c0_0 = arith.constant 0 : index
    %0 = vector.load %arg2[%c0, %c0_0] : memref<8x128xf32, #tpu.memory_space<vmem>>, vector<8x128xf32>
    %c0_1 = arith.constant 0 : index
    %c0_2 = arith.constant 0 : index
    %1 = vector.load %arg3[%c0_1, %c0_2] : memref<128x128xf32, #tpu.memory_space<vmem>>, vector<128x128xf32>
    %cst = arith.constant dense<0.000000e+00> : vector<8x128xf32>
    %2 = tpu.matmul %0, %1, %cst {dimension_numbers = #tpu.dot_dimension_numbers<[1], [0], [0], [1], [0, 0, 1, 1], [], []>} : vector<8x128xf32>, vector<128x128xf32>, vector<8x128xf32> -> vector<8x128xf32>
    %c0_3 = arith.constant 0 : index
    %c0_4 = arith.constant 0 : index
    %3 = vector.load %arg4[%c0_3, %c0_4] : memref<1x128xf32, #tpu.memory_space<vmem>>, vector<1x128xf32>
    %4 = vector.broadcast %3 : vector<1x128xf32> to vector<8x128xf32>
    %5 = arith.addf %2, %4 : vector<8x128xf32>
    %c0_5 = arith.constant 0 : index
    %c0_6 = arith.constant 0 : index
    %6 = vector.load %arg5[%c0_5, %c0_6] : memref<8x128xf32, #tpu.memory_space<vmem>>, vector<8x128xf32>
    tpu.vector_store %arg5[%c0_5, %c0_6], %5 {strides = array<i32>} : memref<8x128xf32, #tpu.memory_space<vmem>>, vector<8x128xf32>,
    return
  }
  func.func @transform_0(%arg0: i32, %arg1: i32) -> (i32, i32) {
    %c0_i32 = arith.constant 0 : i32
    %c0_i32_0 = arith.constant 0 : i32
    return %arg0, %c0_i32 : i32, i32
  }
  func.func @transform_1(%arg0: i32, %arg1: i32) -> (i32, i32) {
    %c0_i32 = arith.constant 0 : i32
    %c0_i32_0 = arith.constant 0 : i32
    return %c0_i32, %arg1 : i32, i32
  }
  func.func @transform_2(%arg0: i32, %arg1: i32) -> (i32, i32) {
    %c0_i32 = arith.constant 0 : i32
    %c0_i32_0 = arith.constant 0 : i32
    return %c0_i32, %arg1 : i32, i32
  }
  func.func @transform_3(%arg0: i32, %arg1: i32) -> (i32, i32) {
    %c0_i32 = arith.constant 0 : i32
    return %arg0, %arg1 : i32, i32
  }
}

</mosaic_0001>

<llo_original>
// kernel: tpu_custom_call.1
$region0: #{tpu_custom_call.1}
  #allocation0 [shape = 'u32[]', space=smem, size = 0x4, offset = 0x4, fixed_abs, tag = 'smem constant byte address 0x4 - core index']
  #allocation1 [shape = 'u32[144,128]{1,0:T(1,128)}', space=vmem, size = 0x12000, scoped, tag = 'internal scratch']
  %s0 = inlined_call_operand.hbm [shape: f32[8,128], index: 0, kind: input, shape index: {}]
  %s1 = inlined_call_operand.hbm [shape: f32[128,128], index: 1, kind: input, shape index: {}]
  %s2 = inlined_call_operand.vmem [shape: f32[1,128], index: 2, kind: input, shape index: {}]
  %s3 = inlined_call_operand.hbm [shape: f32[8,128], index: 3, kind: output, shape index: {}]
  %s4 = sld [smem:[#allocation0]]
  $region30: #{tpu_custom_call.1} parent=0
    _
  %s6 = ssub.s32 1, %s4
  %s7 = scalar_select 0, %s6, %s4
  $region1: #{tpu_custom_call.1} parent=0
    #allocation2 [shape = 'u8[4096]{0}', space=vmem, size = 0x1000, scoped, tag = 'input window, operand 0, single buffered']
    #allocation3 [shape = 's32[1]{0}', space=sflag, size = 0x4, scoped, tag = 'scoped memory for tpu_custom_call.1']
    #allocation4 [shape = 's32[1]{0}', space=sflag, size = 0x4, scoped, tag = 'scoped memory for tpu_custom_call.1']
    #allocation5 [shape = 'u8[65536]{0}', space=vmem, size = 0x10000, scoped, tag = 'input window, operand 1, single buffered']
    #allocation6 [shape = 's32[1]{0}', space=sflag, size = 0x4, scoped, tag = 'scoped memory for tpu_custom_call.1']
    #allocation7 [shape = 'u8[4096]{0}', space=vmem, size = 0x1000, scoped, tag = 'output window, operand 0, single buffered']
    %8 = vsyncpa [#allocation3], 0
    %9 = vsyncpa [#allocation6], 0
    %10 = vsyncpa [#allocation4], 0
    // Predicated region
    $region2: #{tpu_custom_call.1} parent=1 // pred_check
      _
    $region3: #{tpu_custom_call.1} parent=1 // pred_check_branch
      %12 = sbr.rel (0) target = $region5
    $region4: #{tpu_custom_call.1} parent=1 // pred_region
      %s14 = ssub.s32 128, 128
      %15 = vsyncadd [#allocation3], %s14
      %s17 = sshll.u32 [#allocation2], 4
      %s18 = int_to_ptr.vmem [resolvable:$true] %s17
      %20 = dma.hbm_to_vmem [thread:$0]  %s0, 128, %s18, [#allocation3]
    $region5: #{tpu_custom_call.1} parent=1 // pred_fallthru
      _
    // Predicated region
    $region6: #{tpu_custom_call.1} parent=1 // pred_check
      _
    $region7: #{tpu_custom_call.1} parent=1 // pred_check_branch
      %22 = sbr.rel (0) target = $region9
    $region8: #{tpu_custom_call.1} parent=1 // pred_region
      %s24 = ssub.s32 2048, 2048
      %25 = vsyncadd [#allocation6], %s24
      %s26 = sshll.u32 [#allocation5], 4
      %s27 = int_to_ptr.vmem [resolvable:$true] %s26
      %32 = dma.hbm_to_vmem [thread:$0]  %s1, 2048, %s27, [#allocation6], 128, 128, 8
    $region9: #{tpu_custom_call.1} parent=1 // pred_fallthru
      _
    // Predicated region
    $region10: #{tpu_custom_call.1} parent=1 // pred_check
      _
    $region11: #{tpu_custom_call.1} parent=1 // pred_check_branch
      %34 = sbr.rel (0) target = $region13
    $region12: #{tpu_custom_call.1} parent=1 // pred_region
      _
    $region13: #{tpu_custom_call.1} parent=1 // pred_fallthru
      _
    // Predicated region
    $region14: #{tpu_custom_call.1} parent=1 // pred_check
      _
    $region15: #{tpu_custom_call.1} parent=1 // pred_check_branch
      %36 = sbr.rel (0) target = $region17
    $region16: #{tpu_custom_call.1} parent=1 // pred_region
      %37 = dma.done [#allocation3], 128
    $region17: #{tpu_custom_call.1} parent=1 // pred_fallthru
      _
    // Predicated region
    $region18: #{tpu_custom_call.1} parent=1 // pred_check
      _
    $region19: #{tpu_custom_call.1} parent=1 // pred_check_branch
      %39 = sbr.rel (0) target = $region21
    $region20: #{tpu_custom_call.1} parent=1 // pred_region
      %40 = dma.done [#allocation6], 2048
    $region21: #{tpu_custom_call.1} parent=1 // pred_fallthru
      _
    %v41 = vld [vmem:[#allocation2] sm:$0xff]
    %v42 = vld [vmem:[#allocation5] sm:$0xff]
    %v43 = vld [vmem:[#allocation5 + $0x8] sm:$0xff]
    %v44 = vld [vmem:[#allocation5 + $0x10] sm:$0xff]
    %v45 = vld [vmem:[#allocation5 + $0x18] sm:$0xff]
    %v46 = vld [vmem:[#allocation5 + $0x20] sm:$0xff]
    %v47 = vld [vmem:[#allocation5 + $0x28] sm:$0xff]
    %v48 = vld [vmem:[#allocation5 + $0x30] sm:$0xff]
    %v49 = vld [vmem:[#allocation5 + $0x38] sm:$0xff]
    %v50 = vld [vmem:[#allocation5 + $0x40] sm:$0xff]
    %v51 = vld [vmem:[#allocation5 + $0x48] sm:$0xff]
    %v52 = vld [vmem:[#allocation5 + $0x50] sm:$0xff]
    %v53 = vld [vmem:[#allocation5 + $0x58] sm:$0xff]
    %v54 = vld [vmem:[#allocation5 + $0x60] sm:$0xff]
    %v55 = vld [vmem:[#allocation5 + $0x68] sm:$0xff]
    %v56 = vld [vmem:[#allocation5 + $0x70] sm:$0xff]
    %v57 = vld [vmem:[#allocation5 + $0x78] sm:$0xff]
    %v58 = vld [vmem:[%s2] sm:$0x1]
    %v60 = vlaneseq
    %v61 = vshrl.u32 %v60, 7
    %v62 = vsub.s32 0, %v61
    %v63 = vrot.slane %v58, %v62
    %65 = vmatprep.subr.mxu0 0.0
    %66 = vmatpush1.msra.mxu0 %v57
    %67 = vmatprep.subr.mxu0 0.0
    %68 = vmatpush1.msra.mxu0 %v56
    %69 = vmatprep.subr.mxu0 0.0
    %70 = vmatpush1.msra.mxu0 %v55
    %71 = vmatprep.subr.mxu0 0.0
    %72 = vmatpush1.msra.mxu0 %v54
    %73 = vmatprep.subr.mxu0 0.0
    %74 = vmatpush1.msra.mxu0 %v53
    %75 = vmatprep.subr.mxu0 0.0
    %76 = vmatpush1.msra.mxu0 %v52
    %77 = vmatprep.subr.mxu0 0.0
    %78 = vmatpush1.msra.mxu0 %v51
    %79 = vmatprep.subr.mxu0 0.0
    %80 = vmatpush1.msra.mxu0 %v50
    %81 = vmatprep.subr.mxu0 0.0
    %82 = vmatpush1.msra.mxu0 %v49
    %83 = vmatprep.subr.mxu0 0.0
    %84 = vmatpush1.msra.mxu0 %v48
    %85 = vmatprep.subr.mxu0 0.0
    %86 = vmatpush1.msra.mxu0 %v47
    %87 = vmatprep.subr.mxu0 0.0
    %88 = vmatpush1.msra.mxu0 %v46
    %89 = vmatprep.subr.mxu0 0.0
    %90 = vmatpush1.msra.mxu0 %v45
    %91 = vmatprep.subr.mxu0 0.0
    %92 = vmatpush1.msra.mxu0 %v44
    %93 = vmatprep.subr.mxu0 0.0
    %94 = vmatpush1.msra.mxu0 %v43
    %95 = vmatprep.subr.mxu0 0.0
    %96 = vmatpush1.msra.mxu0 %v42
    %97 = vmatprep.subr.mxu0 0.0
    %98 = vmatpush2.msra.mxu0 0.0
    %99 = vmatprep.subr.mxu0 0.0
    %100 = vmatpush2.msra.mxu0 0.0
    %101 = vmatprep.subr.mxu0 0.0
    %102 = vmatpush2.msra.mxu0 0.0
    %103 = vmatprep.subr.mxu0 0.0
    %104 = vmatpush2.msra.mxu0 0.0
    %105 = vmatprep.subr.mxu0 0.0
    %106 = vmatpush2.msra.mxu0 0.0
    %107 = vmatprep.subr.mxu0 0.0
    %108 = vmatpush2.msra.mxu0 0.0
    %109 = vmatprep.subr.mxu0 0.0
    %110 = vmatpush2.msra.mxu0 0.0
    %111 = vmatprep.subr.mxu0 0.0
    %112 = vmatpush2.msra.mxu0 0.0
    %113 = vmatprep.subr.mxu0 0.0
    %114 = vmatpush2.msra.mxu0 0.0
    %115 = vmatprep.subr.mxu0 0.0
    %116 = vmatpush2.msra.mxu0 0.0
    %117 = vmatprep.subr.mxu0 0.0
    %118 = vmatpush2.msra.mxu0 0.0
    %119 = vmatprep.subr.mxu0 0.0
    %120 = vmatpush2.msra.mxu0 0.0
    %121 = vmatprep.subr.mxu0 0.0
    %122 = vmatpush2.msra.mxu0 0.0
    %123 = vmatprep.subr.mxu0 0.0
    %124 = vmatpush2.msra.mxu0 0.0
    %125 = vmatprep.subr.mxu0 0.0
    %126 = vmatpush2.msra.mxu0 0.0
    %127 = vmatprep.subr.mxu0 0.0
    %128 = vmatpush2.msra.mxu0 0.0
    %129 = vmatprep.mubr.f32.mxu0 0.0
    %130 = vmatmul.mubr.f32.gmra.mxu0 %v41
    %v131 = vpop.f32.mrf.mxu0
    %v132 = vadd.f32 %v63, %v131
    %v133 = vpop.f32.mrf.mxu0
    %134 = vdwg.mxu0
    %135 = vst [vmem:[#allocation7] sm:$0xff] %v132
    // Predicated region
    $region22: #{tpu_custom_call.1} parent=1 // pred_check
      _
    $region23: #{tpu_custom_call.1} parent=1 // pred_check_branch
      %137 = sbr.rel (0) target = $region25
    $region24: #{tpu_custom_call.1} parent=1 // pred_region
      %s139 = ssub.s32 128, 128
      %140 = vsyncadd [#allocation4], %s139
      %s142 = sshll.u32 [#allocation7], 4
      %s143 = int_to_ptr.vmem [resolvable:$true] %s142
      %145 = dma.vmem_to_hbm [thread:$0]  %s143, 128, %s3, [#allocation4]
    $region25: #{tpu_custom_call.1} parent=1 // pred_fallthru
      _
    // Predicated region
    $region26: #{tpu_custom_call.1} parent=1 // pred_check
      _
    $region27: #{tpu_custom_call.1} parent=1 // pred_check_branch
      %147 = sbr.rel (0) target = $region29
    $region28: #{tpu_custom_call.1} parent=1 // pred_region
      %148 = dma.done [#allocation4], 128
    $region29: #{tpu_custom_call.1} parent=1 // pred_fallthru
      _
    %149 = vsyncpa [#allocation3], 1
    %150 = vsyncpa [#allocation6], 1
    %151 = vsyncpa [#allocation4], 1

</llo_original>
